<compile_context>
chip_gen: v5e
topology: v5e:2x2
jax: 0.10.0
libtpu: 0.0.40
codegen_flags: <defaults>
</compile_context>

<pallas_src>
import jax
import jax.numpy as jnp
from jax import lax
from jax.experimental import pallas as pl
from jax.experimental.pallas import tpu as pltpu

_MIB = 1024 * 1024


def _round_up(x, m):
    return ((x + m - 1) // m) * m


def _vmem_capacity_bytes():
    try:
        return int(pltpu.get_tpu_info().vmem_capacity_bytes)
    except Exception:
        return 64 * _MIB  # v7x per-TensorCore VMEM; conservative for v5e/v6e.


def _choose_tm(tokens, row_bytes, max_rows):
    """Rows per grid step: ~2 MiB output tile, multiple of 8, >= ~4 grid steps."""
    target_tile_bytes = 2 * _MIB
    tm = max(8, (target_tile_bytes // max(row_bytes, 1)) // 8 * 8)
    tm = min(tm, max_rows)
    # Keep at least ~4 grid steps so the parallel axis feeds both TCs on v7x.
    tm = min(tm, _round_up(pl.cdiv(tokens, 4), 8))
    return max(8, int(tm))


def _vmem_gather_kernel(ids_ref, table_ref, out_ref):
    # ids_ref:   SMEM (padded_tokens,) int32 — scalar-prefetched token ids
    # table_ref: VMEM (V, E) embedding table (resident; block index constant)
    # out_ref:   VMEM (TM, E) output tile
    tm = out_ref.shape[0]
    base = pl.program_id(0) * tm

    def copy_row(r, carry):
        tok = ids_ref[base + r]
        out_ref[pl.ds(r, 1), :] = table_ref[pl.ds(tok, 1), :]
        return carry

    lax.fori_loop(0, tm, copy_row, 0, unroll=8)


def _hbm_gather_kernel(ids_ref, table_hbm, out_ref, sem):
    # ids_ref:   SMEM (padded_tokens,) int32
    # table_hbm: (V, E) embedding table left in HBM (pl.ANY)
    # out_ref:   VMEM (TM, E) output tile — gathered rows DMA straight here
    # sem:       (1,) shared DMA semaphore
    tm = out_ref.shape[0]
    base = pl.program_id(0) * tm

    # Issue all TM row-gather DMAs first (this also keeps every SMEM id read
    # ahead of the first wait), then drain with descriptor-based waits.
    def start_row(r, carry):
        tok = ids_ref[base + r]
        pltpu.make_async_copy(
            table_hbm.at[pl.ds(tok, 1)],   # (1, E) row in HBM
            out_ref.at[pl.ds(r, 1)],       # (1, E) row of the output tile
            sem.at[0],
        ).start()
        return carry

    lax.fori_loop(0, tm, start_row, 0)

    def wait_row(r, carry):
        # Same-size descriptor; the source row index is irrelevant for wait().
        pltpu.make_async_copy(
            table_hbm.at[pl.ds(0, 1)],
            out_ref.at[pl.ds(r, 1)],
            sem.at[0],
        ).wait()
        return carry

    lax.fori_loop(0, tm, wait_row, 0)


def word_embedding(x, table, *, force_hbm_gather=False):
    """x: (N, L) integer token ids; table: (V, E). Returns (N, L, E)."""
    n, seq_len = x.shape
    v, e = table.shape
    tokens = n * seq_len
    row_bytes = e * table.dtype.itemsize
    table_bytes = v * row_bytes

    vmem_cap = _vmem_capacity_bytes()
    vmem_usable = int(vmem_cap * 0.8)

    # Path selection: keep the table resident in VMEM when (double-buffered
    # table + double-buffered output tile + slack) fits the generation budget.
    tm_vmem = _choose_tm(tokens, row_bytes, max_rows=2048)
    fits_vmem = (2 * table_bytes + 2 * tm_vmem * row_bytes + 2 * _MIB) <= vmem_usable
    use_vmem_table = fits_vmem and not force_hbm_gather

    tm = tm_vmem if use_vmem_table else _choose_tm(tokens, row_bytes, max_rows=256)

    # Flatten + clamp ids (torch.nn.Embedding raises on out-of-range ids).
    # TODO(synk): surface out-of-range ids as an error instead of clamping.
    ids_flat = jnp.clip(x.reshape(tokens).astype(jnp.int32), 0, v - 1)

    num_tiles = pl.cdiv(tokens, tm)
    padded_tokens = num_tiles * tm
    if padded_tokens != tokens:
        ids_flat = jnp.pad(ids_flat, (0, padded_tokens - tokens))

    compiler_params = pltpu.CompilerParams(
        dimension_semantics=("parallel",),
        vmem_limit_bytes=vmem_usable,
    )

    if use_vmem_table:
        grid_spec = pltpu.PrefetchScalarGridSpec(
            num_scalar_prefetch=1,                            # ids -> SMEM
            grid=(num_tiles,),
            in_specs=[
                pl.BlockSpec((v, e), lambda i, ids: (0, 0)),  # resident table
            ],
            out_specs=pl.BlockSpec((tm, e), lambda i, ids: (i, 0)),
        )
        kernel = _vmem_gather_kernel
    else:
        grid_spec = pltpu.PrefetchScalarGridSpec(
            num_scalar_prefetch=1,
            grid=(num_tiles,),
            in_specs=[
                pl.BlockSpec(memory_space=pl.ANY),            # table in HBM
            ],
            out_specs=pl.BlockSpec((tm, e), lambda i, ids: (i, 0)),
            scratch_shapes=[pltpu.SemaphoreType.DMA((1,))],
        )
        kernel = _hbm_gather_kernel

    out_flat = pl.pallas_call(
        kernel,
        out_shape=jax.ShapeDtypeStruct((padded_tokens, e), table.dtype),
        grid_spec=grid_spec,
        compiler_params=compiler_params,
    )(ids_flat, table)

    return out_flat[:tokens].reshape(n, seq_len, e)


if __name__ == "__main__":
    # Small, deterministic setup consistent with WordEmbedding(vocab_size, embd_size)
    vocab_size = 64
    embd_size = 128
    batch = 2
    sentence_len = 8

    key = jax.random.PRNGKey(0)
    k_w, k_x = jax.random.split(key)

    # nn.Embedding default init ~ N(0, 1); deterministic synthetic weights here.
    embd_weight = jax.random.normal(k_w, (vocab_size, embd_size), dtype=jnp.float32)
    x = jax.random.randint(k_x, (batch, sentence_len), 0, vocab_size, dtype=jnp.int32)

    ref = jnp.take(embd_weight, x, axis=0)   # == torch embedding semantics

    # Fast path: table resident in VMEM.
    out = jax.block_until_ready(word_embedding(x, embd_weight))
    assert out.shape == (batch, sentence_len, embd_size)
    assert out.dtype == jnp.float32
    assert jnp.array_equal(out, ref), "VMEM-path mismatch vs reference gather"

    # Fallback path: table left in HBM, rows DMA'd directly into the output tile.
    out_hbm = jax.block_until_ready(word_embedding(x, embd_weight, force_hbm_gather=True))
    assert jnp.array_equal(out_hbm, ref), "HBM-path mismatch vs reference gather"

    print("KERNEL_OK")
</pallas_src>

<mosaic_0001>
module attributes {stable_mosaic.version = 11 : i64} {
  func.func @_vmem_gather_kernel(%arg0: i32, %arg1: memref<16xi32, #tpu.memory_space<smem>>, %arg2: memref<64x128xf32, #tpu.memory_space<vmem>>, %arg3: memref<8x128xf32, #tpu.memory_space<vmem>>) attributes {dimension_semantics = [#tpu.dimension_semantics<parallel>], iteration_bounds = array<i64: 2>, scalar_prefetch = 1 : i64, scratch_operands = 0 : i64, tpu.core_type = #tpu.core_type<tc>, window_params = [{pipeline_mode = #tpu.pipeline_mode<synchronous>, transform_indices = @transform_0, window_bounds = array<i64: 64, 128>}, {transform_indices = @transform_1, window_bounds = array<i64: 8, 128>}]} {
    %c8_i32 = arith.constant 8 : i32
    %0 = arith.muli %arg0, %c8_i32 : i32
    %c0_i32 = arith.constant 0 : i32
    %1 = arith.addi %0, %c0_i32 : i32
    %2 = arith.index_cast %1 : i32 to index
    %3 = memref.load %arg1[%2] : memref<16xi32, #tpu.memory_space<smem>>
    %4 = arith.index_cast %3 : i32 to index
    %c0 = arith.constant 0 : index
    %5 = vector.load %arg2[%4, %c0] : memref<64x128xf32, #tpu.memory_space<vmem>>, vector<1x128xf32>
    %6 = arith.index_cast %c0_i32 : i32 to index
    %c0_0 = arith.constant 0 : index
    %7 = vector.load %arg3[%6, %c0_0] : memref<8x128xf32, #tpu.memory_space<vmem>>, vector<1x128xf32>
    tpu.vector_store %arg3[%6, %c0_0], %5 {strides = array<i32>} : memref<8x128xf32, #tpu.memory_space<vmem>>, vector<1x128xf32>,
    %c1_i32 = arith.constant 1 : i32
    %8 = arith.addi %0, %c1_i32 : i32
    %9 = arith.index_cast %8 : i32 to index
    %10 = memref.load %arg1[%9] : memref<16xi32, #tpu.memory_space<smem>>
    %11 = arith.index_cast %10 : i32 to index
    %c0_1 = arith.constant 0 : index
    %12 = vector.load %arg2[%11, %c0_1] : memref<64x128xf32, #tpu.memory_space<vmem>>, vector<1x128xf32>
    %13 = arith.index_cast %c1_i32 : i32 to index
    %c0_2 = arith.constant 0 : index
    %14 = vector.load %arg3[%13, %c0_2] : memref<8x128xf32, #tpu.memory_space<vmem>>, vector<1x128xf32>
    tpu.vector_store %arg3[%13, %c0_2], %12 {strides = array<i32>} : memref<8x128xf32, #tpu.memory_space<vmem>>, vector<1x128xf32>,
    %c2_i32 = arith.constant 2 : i32
    %15 = arith.addi %0, %c2_i32 : i32
    %16 = arith.index_cast %15 : i32 to index
    %17 = memref.load %arg1[%16] : memref<16xi32, #tpu.memory_space<smem>>
    %18 = arith.index_cast %17 : i32 to index
    %c0_3 = arith.constant 0 : index
    %19 = vector.load %arg2[%18, %c0_3] : memref<64x128xf32, #tpu.memory_space<vmem>>, vector<1x128xf32>
    %20 = arith.index_cast %c2_i32 : i32 to index
    %c0_4 = arith.constant 0 : index
    %21 = vector.load %arg3[%20, %c0_4] : memref<8x128xf32, #tpu.memory_space<vmem>>, vector<1x128xf32>
    tpu.vector_store %arg3[%20, %c0_4], %19 {strides = array<i32>} : memref<8x128xf32, #tpu.memory_space<vmem>>, vector<1x128xf32>,
    %c3_i32 = arith.constant 3 : i32
    %22 = arith.addi %0, %c3_i32 : i32
    %23 = arith.index_cast %22 : i32 to index
    %24 = memref.load %arg1[%23] : memref<16xi32, #tpu.memory_space<smem>>
    %25 = arith.index_cast %24 : i32 to index
    %c0_5 = arith.constant 0 : index
    %26 = vector.load %arg2[%25, %c0_5] : memref<64x128xf32, #tpu.memory_space<vmem>>, vector<1x128xf32>
    %27 = arith.index_cast %c3_i32 : i32 to index
    %c0_6 = arith.constant 0 : index
    %28 = vector.load %arg3[%27, %c0_6] : memref<8x128xf32, #tpu.memory_space<vmem>>, vector<1x128xf32>
    tpu.vector_store %arg3[%27, %c0_6], %26 {strides = array<i32>} : memref<8x128xf32, #tpu.memory_space<vmem>>, vector<1x128xf32>,
    %c4_i32 = arith.constant 4 : i32
    %29 = arith.addi %0, %c4_i32 : i32
    %30 = arith.index_cast %29 : i32 to index
    %31 = memref.load %arg1[%30] : memref<16xi32, #tpu.memory_space<smem>>
    %32 = arith.index_cast %31 : i32 to index
    %c0_7 = arith.constant 0 : index
    %33 = vector.load %arg2[%32, %c0_7] : memref<64x128xf32, #tpu.memory_space<vmem>>, vector<1x128xf32>
    %34 = arith.index_cast %c4_i32 : i32 to index
    %c0_8 = arith.constant 0 : index
    %35 = vector.load %arg3[%34, %c0_8] : memref<8x128xf32, #tpu.memory_space<vmem>>, vector<1x128xf32>
    tpu.vector_store %arg3[%34, %c0_8], %33 {strides = array<i32>} : memref<8x128xf32, #tpu.memory_space<vmem>>, vector<1x128xf32>,
    %c5_i32 = arith.constant 5 : i32
    %36 = arith.addi %0, %c5_i32 : i32
    %37 = arith.index_cast %36 : i32 to index
    %38 = memref.load %arg1[%37] : memref<16xi32, #tpu.memory_space<smem>>
    %39 = arith.index_cast %38 : i32 to index
    %c0_9 = arith.constant 0 : index
    %40 = vector.load %arg2[%39, %c0_9] : memref<64x128xf32, #tpu.memory_space<vmem>>, vector<1x128xf32>
    %41 = arith.index_cast %c5_i32 : i32 to index
    %c0_10 = arith.constant 0 : index
    %42 = vector.load %arg3[%41, %c0_10] : memref<8x128xf32, #tpu.memory_space<vmem>>, vector<1x128xf32>
    tpu.vector_store %arg3[%41, %c0_10], %40 {strides = array<i32>} : memref<8x128xf32, #tpu.memory_space<vmem>>, vector<1x128xf32>,
    %c6_i32 = arith.constant 6 : i32
    %43 = arith.addi %0, %c6_i32 : i32
    %44 = arith.index_cast %43 : i32 to index
    %45 = memref.load %arg1[%44] : memref<16xi32, #tpu.memory_space<smem>>
    %46 = arith.index_cast %45 : i32 to index
    %c0_11 = arith.constant 0 : index
    %47 = vector.load %arg2[%46, %c0_11] : memref<64x128xf32, #tpu.memory_space<vmem>>, vector<1x128xf32>
    %48 = arith.index_cast %c6_i32 : i32 to index
    %c0_12 = arith.constant 0 : index
    %49 = vector.load %arg3[%48, %c0_12] : memref<8x128xf32, #tpu.memory_space<vmem>>, vector<1x128xf32>
    tpu.vector_store %arg3[%48, %c0_12], %47 {strides = array<i32>} : memref<8x128xf32, #tpu.memory_space<vmem>>, vector<1x128xf32>,
    %c7_i32 = arith.constant 7 : i32
    %50 = arith.addi %0, %c7_i32 : i32
    %51 = arith.index_cast %50 : i32 to index
    %52 = memref.load %arg1[%51] : memref<16xi32, #tpu.memory_space<smem>>
    %53 = arith.index_cast %52 : i32 to index
    %c0_13 = arith.constant 0 : index
    %54 = vector.load %arg2[%53, %c0_13] : memref<64x128xf32, #tpu.memory_space<vmem>>, vector<1x128xf32>
    %55 = arith.index_cast %c7_i32 : i32 to index
    %c0_14 = arith.constant 0 : index
    %56 = vector.load %arg3[%55, %c0_14] : memref<8x128xf32, #tpu.memory_space<vmem>>, vector<1x128xf32>
    tpu.vector_store %arg3[%55, %c0_14], %54 {strides = array<i32>} : memref<8x128xf32, #tpu.memory_space<vmem>>, vector<1x128xf32>,
    %c8_i32_15 = arith.constant 8 : i32
    return
  }
  func.func @transform_0(%arg0: i32, %arg1: memref<16xi32, #tpu.memory_space<smem>>) -> (i32, i32) {
    %c0_i32 = arith.constant 0 : i32
    %c0_i32_0 = arith.constant 0 : i32
    %c0_i32_1 = arith.constant 0 : i32
    return %c0_i32, %c0_i32_0 : i32, i32
  }
  func.func @transform_1(%arg0: i32, %arg1: memref<16xi32, #tpu.memory_space<smem>>) -> (i32, i32) {
    %c0_i32 = arith.constant 0 : i32
    %c0_i32_0 = arith.constant 0 : i32
    return %arg0, %c0_i32 : i32, i32
  }
}

</mosaic_0001>

<llo_original>
// kernel: tpu_custom_call.1
$region0: #{tpu_custom_call.1}
  #allocation0 [shape = 'u32[]', space=smem, size = 0x4, offset = 0x4, fixed_abs, tag = 'smem constant byte address 0x4 - core index']
  #allocation1 [shape = 'u32[72,128]{1,0:T(1,128)}', space=vmem, size = 0x9000, scoped, tag = 'internal scratch']
  #allocation2 [shape = 's32[1]{0}', space=sflag, size = 0x4, scoped, tag = 'scoped memory for tpu_custom_call.1']
  #allocation3 [shape = 'u8[512]{0}', space=smem, size = 0x200, scoped, tag = 'prefetched SMEM operand 0']
  %s0 = inlined_call_operand.hbm [shape: s32[16], index: 0, kind: input, shape index: {}]
  %s1 = inlined_call_operand.hbm [shape: f32[64,128], index: 1, kind: input, shape index: {}]
  %s2 = inlined_call_operand.hbm [shape: f32[16,128], index: 2, kind: output, shape index: {}]
  %s3 = sld [smem:[#allocation0]]
  $region41: #{tpu_custom_call.1} parent=0
    _
  %s5 = ssub.s32 1, %s3
  %s6 = scalar_select 0, %s5, %s3
  %s8 = sshll.u32 %s0, 4
  %s9 = int_to_ptr.hbm [resolvable:$true] %s8
  %11 = dma.hbm_to_smem %s9, 16, [#allocation3], [#allocation2]
  %13 = dma.done [#allocation2], 16
  %14 = sfence
  $region1: #{tpu_custom_call.1} parent=0
    #allocation4 [shape = 'u8[32768]{0}', space=vmem, size = 0x8000, scoped, tag = 'input window, operand 1, single buffered']
    #allocation5 [shape = 's32[2]{0}', space=sflag, size = 0x8, scoped, tag = 'scoped memory for tpu_custom_call.1']
    #allocation6 [shape = 's32[2]{0}', space=sflag, size = 0x8, scoped, tag = 'scoped memory for tpu_custom_call.1']
    #allocation7 [shape = 'u8[8192]{0}', space=vmem, size = 0x2000, scoped, tag = 'output window, operand 0']
    %15 = vsyncpa [#allocation5], 0
    %16 = vsyncpa [#allocation6], 0
    %s17 = scalar_lea.sflag [#allocation6], 1
    %18 = vsyncpa %s17, 0
    loop: start=0, step=1, limit=4
    $region2: #{tpu_custom_call.1} parent=1 // loop_pre_header
      _
    $region3: #{tpu_custom_call.1} parent=1 // loop_header
      %s20 = sphi 0, %s24
      %p21 = scmp.ge.s32.totalorder %s20, 4
      %s28 = sphi 0, %s28
      %s30 = sphi 0, %s28
      %s31 = sphi 0, %s30
      %s45 = sphi 0, %s31
      %s51 = sphi 0, %s53
      %s54 = sphi 0, %s51
      %s55 = sphi 0, %s54
      %s71 = sphi 0, %s55
    $region4: #{tpu_custom_call.1} parent=1 // loop_header_branch
      %23 = sbr.rel (%p21) target = $region8
    $region5: #{tpu_custom_call.1} parent=1 // loop_body
      %s25 = ssub.s32 %s20, 1
      %s26 = ssub.s32 %s20, 2
      %s27 = sadd.s32 %s20, 1
      %s29 = sadd.s32 %s28, 1
      %p32 = scmp.eq.s32.totalorder %s20, 1
      %p33 = scmp.ne.s32.totalorder %s28, %s30
      %p34 = scmp.eq.s32.totalorder %s20, 0
      %p35 = por %p33, %p34
      %p36 = scmp.ne.s32.totalorder %s28, %s30
      %p37 = scmp.eq.s32.totalorder %s25, 1
      %p38 = por %p36, %p37
      %p39 = scmp.ne.s32.totalorder %s30, %s31
      %p40 = scmp.eq.s32.totalorder %s25, 0
      %p41 = por %p39, %p40
      %p42 = scmp.ne.s32.totalorder %s30, %s31
      %p43 = scmp.eq.s32.totalorder %s26, 1
      %p44 = por %p42, %p43
      %p46 = scmp.ne.s32.totalorder %s31, %s45
      %p47 = scmp.eq.s32.totalorder %s26, 0
      %p48 = por %p46, %p47
      %s49 = ssub.s32 %s20, %s27
      %p50 = scmp.eq.s32.totalorder %s49, 0
      %s52 = sadd.s32 %s51, 1
      %s53 = scalar_select %p50, %s51, %s52
      %p56 = pneg %p50
      %p57 = scmp.eq.s32.totalorder %s20, 1
      %p58 = por %p56, %p57
      %p59 = scmp.ne.s32.totalorder %s51, %s54
      %p60 = scmp.eq.s32.totalorder %s20, 0
      %p61 = por %p59, %p60
      %p62 = scmp.ne.s32.totalorder %s51, %s54
      %p63 = scmp.eq.s32.totalorder %s25, 1
      %p64 = por %p62, %p63
      %p65 = scmp.ne.s32.totalorder %s54, %s55
      %p66 = scmp.eq.s32.totalorder %s25, 0
      %p67 = por %p65, %p66
      %p68 = scmp.ne.s32.totalorder %s54, %s55
      %p69 = scmp.eq.s32.totalorder %s26, 1
      %p70 = por %p68, %p69
      %p72 = scmp.ne.s32.totalorder %s55, %s71
      %p73 = scmp.eq.s32.totalorder %s26, 0
      %p74 = por %p72, %p73
      %p75 = scmp.le.s32.totalorder 1, %s20
      %p76 = scmp.lt.s32.totalorder %s20, 3
      %p77 = pnand %p75, %p76
      %p78 = pneg %p77
      // Predicated region
      $region9: #{tpu_custom_call.1} parent=5 // pred_check
        _
      $region10: #{tpu_custom_call.1} parent=5 // pred_check_branch
        %80 = sbr.rel (%p77) target = $region12
      $region11: #{tpu_custom_call.1} parent=5 // pred_region
        %s81 = ssub.s32 %s20, 1
        // Predicated region
        $region13: #{tpu_custom_call.1} parent=11 // pred_check
          %p82 = pneg %p41
        $region14: #{tpu_custom_call.1} parent=11 // pred_check_branch
          %84 = sbr.rel (%p82) target = $region16
        $region15: #{tpu_custom_call.1} parent=11 // pred_region
          %86 = vsyncadd [#allocation5], 0
          %s87 = sshll.u32 %s1, 4
          %s88 = int_to_ptr.hbm [resolvable:$true] %s87
          %s89 = sshll.u32 [#allocation4], 4
          %s90 = int_to_ptr.vmem [resolvable:$true] %s89
          %95 = dma.hbm_to_vmem [thread:$0]  %s88, 1024, %s90, [#allocation5], 128, 128, 8
        $region16: #{tpu_custom_call.1} parent=11 // pred_fallthru
          _
      $region12: #{tpu_custom_call.1} parent=5 // pred_fallthru
        _
      %p96 = scmp.lt.s32.totalorder %s20, 2
      // Predicated region
      $region17: #{tpu_custom_call.1} parent=5 // pred_check
        %p97 = pneg %p96
      $region18: #{tpu_custom_call.1} parent=5 // pred_check_branch
        %99 = sbr.rel (%p97) target = $region20
      $region19: #{tpu_custom_call.1} parent=5 // pred_region
        _
      $region20: #{tpu_custom_call.1} parent=5 // pred_fallthru
        _
      %p100 = scmp.le.s32.totalorder 1, %s20
      %p101 = scmp.lt.s32.totalorder %s20, 3
      %p102 = pnand %p100, %p101
      %p103 = pneg %p102
      // Predicated region
      $region21: #{tpu_custom_call.1} parent=5 // pred_check
        _
      $region22: #{tpu_custom_call.1} parent=5 // pred_check_branch
        %105 = sbr.rel (%p102) target = $region24
      $region23: #{tpu_custom_call.1} parent=5 // pred_region
        %s106 = ssub.s32 %s20, 1
        // Predicated region
        $region25: #{tpu_custom_call.1} parent=23 // pred_check
          %p107 = pneg %p41
        $region26: #{tpu_custom_call.1} parent=23 // pred_check_branch
          %109 = sbr.rel (%p107) target = $region28
        $region27: #{tpu_custom_call.1} parent=23 // pred_region
          %111 = dma.done [#allocation5], 1024
        $region28: #{tpu_custom_call.1} parent=23 // pred_fallthru
          _
        %p112 = pneg %p41
        %p113 = pneg %p38
        %p114 = pneg %p67
        %p115 = pneg %p64
        %s116 = sand.u32 %s54, 1
        %s117 = scalar_lea.sflag [#allocation6], %s116
        %s118 = sand.u32 %s54, 1
        %s119 = smul.addr %s118, 8
        %s120 = scalar_lea.vmem [#allocation7], %s119
        %s121 = smul.u32 %s25, 8
        %s122 = sld [smem:[#allocation3 + %s121]]
        %s123 = scalar_lea.vmem [#allocation4], %s122
        %v124 = vld [vmem:[%s123] sm:$0x1]
        %125 = vst [vmem:[%s120] sm:$0x1] %v124
        %s126 = sadd.s32 %s121, 1
        %s127 = sld [smem:[#allocation3 + %s126]]
        %s128 = scalar_lea.vmem [#allocation4], %s127
        %v129 = vld [vmem:[%s128] sm:$0x1]
        %130 = vst [vmem:[%s120 + $0x1] sm:$0x1] %v129
        %s131 = sadd.s32 %s121, 2
        %s132 = sld [smem:[#allocation3 + %s131]]
        %s133 = scalar_lea.vmem [#allocation4], %s132
        %v134 = vld [vmem:[%s133] sm:$0x1]
        %135 = vst [vmem:[%s120 + $0x2] sm:$0x1] %v134
        %s136 = sadd.s32 %s121, 3
        %s137 = sld [smem:[#allocation3 + %s136]]
        %s138 = scalar_lea.vmem [#allocation4], %s137
        %v139 = vld [vmem:[%s138] sm:$0x1]
        %140 = vst [vmem:[%s120 + $0x3] sm:$0x1] %v139
        %s141 = sadd.s32 %s121, 4
        %s142 = sld [smem:[#allocation3 + %s141]]
        %s143 = scalar_lea.vmem [#allocation4], %s142
        %v144 = vld [vmem:[%s143] sm:$0x1]
        %145 = vst [vmem:[%s120 + $0x4] sm:$0x1] %v144
        %s146 = sadd.s32 %s121, 5
        %s147 = sld [smem:[#allocation3 + %s146]]
        %s148 = scalar_lea.vmem [#allocation4], %s147
        %v149 = vld [vmem:[%s148] sm:$0x1]
        %150 = vst [vmem:[%s120 + $0x5] sm:$0x1] %v149
        %s151 = sadd.s32 %s121, 6
        %s152 = sld [smem:[#allocation3 + %s151]]
        %s153 = scalar_lea.vmem [#allocation4], %s152
        %v154 = vld [vmem:[%s153] sm:$0x1]
        %155 = vst [vmem:[%s120 + $0x6] sm:$0x1] %v154
        %s156 = sadd.s32 %s121, 7
        %s157 = sld [smem:[#allocation3 + %s156]]
        %s158 = scalar_lea.vmem [#allocation4], %s157
        %v159 = vld [vmem:[%s158] sm:$0x1]
        %160 = vst [vmem:[%s120 + $0x7] sm:$0x1] %v159
        %s161 = sand.u32 %s54, 1
        %s162 = scalar_lea.sflag [#allocation6], %s161
        %s163 = sand.u32 %s54, 1
        %s164 = smul.addr %s163, 8
        %s165 = scalar_lea.vmem [#allocation7], %s164
        // Predicated region
        $region29: #{tpu_custom_call.1} parent=23 // pred_check
          %p166 = pneg %p64
        $region30: #{tpu_custom_call.1} parent=23 // pred_check_branch
          %168 = sbr.rel (%p166) target = $region32
        $region31: #{tpu_custom_call.1} parent=23 // pred_region
          %170 = vsyncadd %s162, 0
          %s171 = smul.addr %s25, 8
          %s172 = scalar_lea.hbm %s2, %s171
          %s174 = sshll.u32 %s165, 4
          %s175 = int_to_ptr.vmem [resolvable:$true] %s174
          %s176 = sshll.u32 %s172, 4
          %s177 = int_to_ptr.hbm [resolvable:$true] %s176
          %179 = dma.vmem_to_hbm [thread:$0]  %s175, 128, %s177, %s162
        $region32: #{tpu_custom_call.1} parent=23 // pred_fallthru
          _
      $region24: #{tpu_custom_call.1} parent=5 // pred_fallthru
        _
      %p180 = scmp.le.s32.totalorder 2, %s20
      // Predicated region
      $region33: #{tpu_custom_call.1} parent=5 // pred_check
        %p181 = pneg %p180
      $region34: #{tpu_custom_call.1} parent=5 // pred_check_branch
        %183 = sbr.rel (%p181) target = $region36
      $region35: #{tpu_custom_call.1} parent=5 // pred_region
        %s184 = ssub.s32 %s20, 2
        // Predicated region
        $region37: #{tpu_custom_call.1} parent=35 // pred_check
          %p185 = pneg %p70
        $region38: #{tpu_custom_call.1} parent=35 // pred_check_branch
          %187 = sbr.rel (%p185) target = $region40
        $region39: #{tpu_custom_call.1} parent=35 // pred_region
          %s188 = sand.u32 %s55, 1
          %s189 = scalar_lea.sflag [#allocation6], %s188
          %s190 = sand.u32 %s55, 1
          %s191 = smul.addr %s190, 8
          %s192 = scalar_lea.vmem [#allocation7], %s191
          %194 = dma.done %s189, 128
        $region40: #{tpu_custom_call.1} parent=35 // pred_fallthru
          _
      $region36: #{tpu_custom_call.1} parent=5 // pred_fallthru
        _
    $region6: #{tpu_custom_call.1} parent=1 // loop_footer
      %s24 = sadd.s32 1, %s20
    $region7: #{tpu_custom_call.1} parent=1 // loop_footer_branch
      %19 = sbr.rel target = $region3
    $region8: #{tpu_custom_call.1} parent=1 // loop_exit
      _
    %195 = vsyncpa [#allocation5], 1
    %s196 = scalar_lea.sflag [#allocation5], 1
    %197 = vsyncpa %s196, 1
    %198 = vsyncpa [#allocation6], 1
    %s199 = scalar_lea.sflag [#allocation6], 1
    %200 = vsyncpa %s199, 1

</llo_original>
